<compile_context>
chip_gen: v5e
topology: v5e:2x2
jax: 0.10.0
libtpu: 0.0.40
codegen_flags: <defaults>
</compile_context>

<pallas_src>
import functools

import jax
import jax.numpy as jnp
from jax.experimental import pallas as pl
from jax.experimental.pallas import tpu as pltpu

# Original feature sizes.
D_IN = 256           # 1*16*16, already 2*128 lane-aligned
D_H1 = 528
D_H2 = 125
D_OUT = 10
# 128-lane-aligned padded sizes -> dense vregs / unmasked stores.
D_H1_P = 640         # 5*128
D_H2_P = 128
D_OUT_P = 128


def _round_up(x, m):
    return ((x + m - 1) // m) * m


def _mlp_kernel(x_ref, w1_ref, b1_ref, w2_ref, b2_ref, w3_ref, b3_ref, o_ref):
    # x_ref: (TM, 256) in the caller's dtype; cast to the compute dtype here
    # (avoids a wrapper-side HBM convert copy; no-op on the f32 path).
    x = x_ref[...].astype(w1_ref.dtype)
    h1 = jnp.dot(x, w1_ref[...], preferred_element_type=jnp.float32) + b1_ref[...]
    h1 = jnp.maximum(h1, 0.0).astype(w2_ref.dtype)          # (TM, 640)
    h2 = jnp.dot(h1, w2_ref[...], preferred_element_type=jnp.float32) + b2_ref[...]
    h2 = jnp.maximum(h2, 0.0).astype(w3_ref.dtype)           # (TM, 128)
    o_ref[...] = (jnp.dot(h2, w3_ref[...], preferred_element_type=jnp.float32)
                  + b3_ref[...]).astype(o_ref.dtype)          # (TM, 128)


def prepare_params(params, compute_dtype=jnp.bfloat16):
    """One-time layout prep (hoisted out of the per-call path):
    transpose PyTorch (out,in) weights to (in,out), zero-pad features to
    128-lane multiples, and cast matmul operands to the compute dtype
    (bf16 default -> halves weight + activation matmul bytes; the kernel is
    HBM-bound).  Biases stay f32 and are added to the f32 accumulator."""
    w1, b1, w2, b2, w3, b3 = params

    def pad2(a, rows, cols):
        return jnp.pad(a, ((0, rows - a.shape[0]), (0, cols - a.shape[1])))

    w1t = pad2(w1.T, D_IN, D_H1_P).astype(compute_dtype)
    w2t = pad2(w2.T, D_H1_P, D_H2_P).astype(compute_dtype)
    w3t = pad2(w3.T, D_H2_P, D_OUT_P).astype(compute_dtype)
    b1r = jnp.pad(b1, (0, D_H1_P - D_H1)).reshape(1, -1).astype(jnp.float32)
    b2r = jnp.pad(b2, (0, D_H2_P - D_H2)).reshape(1, -1).astype(jnp.float32)
    b3r = jnp.pad(b3, (0, D_OUT_P - D_OUT)).reshape(1, -1).astype(jnp.float32)
    return (w1t, b1r, w2t, b2r, w3t, b3r)


@functools.partial(jax.jit, static_argnames=("block_m",))
def usps_mlp_forward(x, prepped, block_m=1024):
    """x: (B, 1, 16, 16) or (B, 256), any float dtype.
    prepped: output of prepare_params.  Returns (B, 10) float32 logits."""
    w1t, b1r, w2t, b2r, w3t, b3r = prepped
    B = x.shape[0]
    x2d = x.reshape(B, -1)                          # x.view(x.size(0), -1)
    assert x2d.shape[1] == D_IN

    compute_dtype = w1t.dtype
    out_dtype = compute_dtype                       # bf16 out halves store DMA

    # Row tile: 16-row groups for bf16 (sublane packing), 8 for f32.  Keep the
    # grid at >= ~4 steps (>=2 per v7x TensorCore) before growing the tile, and
    # cap at block_m.  No jnp.pad: the ragged final block is masked by Pallas.
    row_align = 16 if compute_dtype == jnp.bfloat16 else 8
    if B <= row_align:
        tm = B                                      # block == full batch dim
    else:
        tm = min(block_m, max(row_align, _round_up(pl.cdiv(B, 4), row_align)))
    grid = pl.cdiv(B, tm)

    resident = lambda shape: pl.BlockSpec(shape, lambda i: (0, 0))

    out = pl.pallas_call(
        _mlp_kernel,
        out_shape=jax.ShapeDtypeStruct((B, D_OUT_P), out_dtype),
        grid_spec=pltpu.PrefetchScalarGridSpec(
            num_scalar_prefetch=0,
            grid=(grid,),
            in_specs=[
                pl.BlockSpec((tm, D_IN), lambda i: (i, 0)),   # streamed x tiles
                resident(w1t.shape), resident(b1r.shape),      # resident weights
                resident(w2t.shape), resident(b2r.shape),
                resident(w3t.shape), resident(b3r.shape),
            ],
            out_specs=pl.BlockSpec((tm, D_OUT_P), lambda i: (i, 0)),
        ),
        compiler_params=pltpu.CompilerParams(
            dimension_semantics=("parallel",),      # megacore sharding on v7x
        ),
    )(x2d, w1t, b1r, w2t, b2r, w3t, b3r)
    # Slice the 10 real logit columns and return f32 (module semantics).
    return out[:, :D_OUT].astype(jnp.float32)


def init_params(key):
    """Deterministic init matching nn.Linear shapes (uniform +-1/sqrt(fan_in))."""
    dims = [(528, 256), (125, 528), (10, 125)]
    params = []
    for (out_f, in_f) in dims:
        key, kw, kb = jax.random.split(key, 3)
        bound = 1.0 / jnp.sqrt(in_f)
        w = jax.random.uniform(kw, (out_f, in_f), jnp.float32, -bound, bound)
        b = jax.random.uniform(kb, (out_f,), jnp.float32, -bound, bound)
        params.extend([w, b])
    return tuple(params)


def reference_forward(x, params):
    w1, b1, w2, b2, w3, b3 = params
    x2d = x.reshape(x.shape[0], -1)
    h1 = jnp.maximum(x2d @ w1.T + b1, 0.0)
    h2 = jnp.maximum(h1 @ w2.T + b2, 0.0)
    return h2 @ w3.T + b3


if __name__ == "__main__":
    key = jax.random.PRNGKey(0)
    kx_small, kx_big, kp = jax.random.split(key, 3)

    params = init_params(kp)

    # f32 path (MXU f32 matmuls use default multi-pass precision -> 1e-3 tol).
    prepped_f32 = prepare_params(params, jnp.float32)

    # Tiny USPS-style batch: (2, 1, 16, 16) -> 256 features.
    x_small = jax.random.normal(kx_small, (2, 1, 16, 16), jnp.float32)
    out_small = jax.block_until_ready(usps_mlp_forward(x_small, prepped_f32))
    ref_small = reference_forward(x_small, params)
    assert out_small.shape == (2, 10)
    assert jnp.allclose(out_small, ref_small, atol=1e-3, rtol=1e-3), "f32 small mismatch"

    # Larger batch exercising the pipelined batch grid with a ragged final block
    # (1000 is not a multiple of the 256-row tile; no wrapper-side padding copy).
    x_big = jax.random.normal(kx_big, (1000, 1, 16, 16), jnp.float32)
    out_big = jax.block_until_ready(usps_mlp_forward(x_big, prepped_f32))
    ref_big = reference_forward(x_big, params)
    assert out_big.shape == (1000, 10)
    assert jnp.allclose(out_big, ref_big, atol=1e-3, rtol=1e-3), "f32 big mismatch"

    # Default bf16 path: bf16 matmul operands + bf16 output slab, f32 accumulate,
    # in-kernel cast of the streamed f32 x (no wrapper convert copy).
    prepped_bf16 = prepare_params(params)           # compute_dtype=bf16 default
    out_bf16 = jax.block_until_ready(usps_mlp_forward(x_big, prepped_bf16))
    assert out_bf16.shape == (1000, 10)
    assert jnp.allclose(out_bf16, ref_big, atol=1e-1, rtol=1e-1), "bf16 mismatch"

    print("KERNEL_OK")
</pallas_src>

<mosaic_0001>
module attributes {stable_mosaic.version = 11 : i64} {
  func.func @_mlp_kernel(%arg0: i32, %arg1: memref<2x256xf32, #tpu.memory_space<vmem>>, %arg2: memref<256x640xf32, #tpu.memory_space<vmem>>, %arg3: memref<1x640xf32, #tpu.memory_space<vmem>>, %arg4: memref<640x128xf32, #tpu.memory_space<vmem>>, %arg5: memref<1x128xf32, #tpu.memory_space<vmem>>, %arg6: memref<128x128xf32, #tpu.memory_space<vmem>>, %arg7: memref<1x128xf32, #tpu.memory_space<vmem>>, %arg8: memref<2x128xf32, #tpu.memory_space<vmem>>) attributes {dimension_semantics = [#tpu.dimension_semantics<parallel>], iteration_bounds = array<i64: 1>, scalar_prefetch = 0 : i64, scratch_operands = 0 : i64, tpu.core_type = #tpu.core_type<tc>, window_params = [{transform_indices = @transform_0, window_bounds = array<i64: 2, 256>}, {pipeline_mode = #tpu.pipeline_mode<synchronous>, transform_indices = @transform_1, window_bounds = array<i64: 256, 640>}, {pipeline_mode = #tpu.pipeline_mode<synchronous>, transform_indices = @transform_2, window_bounds = array<i64: 1, 640>}, {pipeline_mode = #tpu.pipeline_mode<synchronous>, transform_indices = @transform_3, window_bounds = array<i64: 640, 128>}, {pipeline_mode = #tpu.pipeline_mode<synchronous>, transform_indices = @transform_4, window_bounds = array<i64: 1, 128>}, {pipeline_mode = #tpu.pipeline_mode<synchronous>, transform_indices = @transform_5, window_bounds = array<i64: 128, 128>}, {pipeline_mode = #tpu.pipeline_mode<synchronous>, transform_indices = @transform_6, window_bounds = array<i64: 1, 128>}, {transform_indices = @transform_7, window_bounds = array<i64: 2, 128>}]} {
    %c0 = arith.constant 0 : index
    %c0_0 = arith.constant 0 : index
    %0 = vector.load %arg1[%c0, %c0_0] : memref<2x256xf32, #tpu.memory_space<vmem>>, vector<2x256xf32>
    %c0_1 = arith.constant 0 : index
    %c0_2 = arith.constant 0 : index
    %1 = vector.load %arg2[%c0_1, %c0_2] : memref<256x640xf32, #tpu.memory_space<vmem>>, vector<256x640xf32>
    %cst = arith.constant dense<0.000000e+00> : vector<2x640xf32>
    %2 = tpu.matmul %0, %1, %cst {dimension_numbers = #tpu.dot_dimension_numbers<[1], [0], [0], [1], [0, 0, 1, 1], [], []>} : vector<2x256xf32>, vector<256x640xf32>, vector<2x640xf32> -> vector<2x640xf32>
    %c0_3 = arith.constant 0 : index
    %c0_4 = arith.constant 0 : index
    %3 = vector.load %arg3[%c0_3, %c0_4] : memref<1x640xf32, #tpu.memory_space<vmem>>, vector<1x640xf32>
    %4 = vector.broadcast %3 : vector<1x640xf32> to vector<2x640xf32>
    %5 = arith.addf %2, %4 : vector<2x640xf32>
    %cst_5 = arith.constant 0.000000e+00 : f32
    %6 = vector.broadcast %cst_5 : f32 to vector<2x640xf32>
    %7 = arith.maximumf %5, %6 : vector<2x640xf32>
    %c0_6 = arith.constant 0 : index
    %c0_7 = arith.constant 0 : index
    %8 = vector.load %arg4[%c0_6, %c0_7] : memref<640x128xf32, #tpu.memory_space<vmem>>, vector<640x128xf32>
    %cst_8 = arith.constant dense<0.000000e+00> : vector<2x128xf32>
    %9 = tpu.matmul %7, %8, %cst_8 {dimension_numbers = #tpu.dot_dimension_numbers<[1], [0], [0], [1], [0, 0, 1, 1], [], []>} : vector<2x640xf32>, vector<640x128xf32>, vector<2x128xf32> -> vector<2x128xf32>
    %c0_9 = arith.constant 0 : index
    %c0_10 = arith.constant 0 : index
    %10 = vector.load %arg5[%c0_9, %c0_10] : memref<1x128xf32, #tpu.memory_space<vmem>>, vector<1x128xf32>
    %11 = vector.broadcast %10 : vector<1x128xf32> to vector<2x128xf32>
    %12 = arith.addf %9, %11 : vector<2x128xf32>
    %cst_11 = arith.constant 0.000000e+00 : f32
    %13 = vector.broadcast %cst_11 : f32 to vector<2x128xf32>
    %14 = arith.maximumf %12, %13 : vector<2x128xf32>
    %c0_12 = arith.constant 0 : index
    %c0_13 = arith.constant 0 : index
    %15 = vector.load %arg6[%c0_12, %c0_13] : memref<128x128xf32, #tpu.memory_space<vmem>>, vector<128x128xf32>
    %cst_14 = arith.constant dense<0.000000e+00> : vector<2x128xf32>
    %16 = tpu.matmul %14, %15, %cst_14 {dimension_numbers = #tpu.dot_dimension_numbers<[1], [0], [0], [1], [0, 0, 1, 1], [], []>} : vector<2x128xf32>, vector<128x128xf32>, vector<2x128xf32> -> vector<2x128xf32>
    %c0_15 = arith.constant 0 : index
    %c0_16 = arith.constant 0 : index
    %17 = vector.load %arg7[%c0_15, %c0_16] : memref<1x128xf32, #tpu.memory_space<vmem>>, vector<1x128xf32>
    %18 = vector.broadcast %17 : vector<1x128xf32> to vector<2x128xf32>
    %19 = arith.addf %16, %18 : vector<2x128xf32>
    %c0_17 = arith.constant 0 : index
    %c0_18 = arith.constant 0 : index
    %20 = vector.load %arg8[%c0_17, %c0_18] : memref<2x128xf32, #tpu.memory_space<vmem>>, vector<2x128xf32>
    tpu.vector_store %arg8[%c0_17, %c0_18], %19 {strides = array<i32>} : memref<2x128xf32, #tpu.memory_space<vmem>>, vector<2x128xf32>,
    return
  }
  func.func @transform_0(%arg0: i32) -> (i32, i32) {
    %c0_i32 = arith.constant 0 : i32
    %c0_i32_0 = arith.constant 0 : i32
    return %arg0, %c0_i32 : i32, i32
  }
  func.func @transform_1(%arg0: i32) -> (i32, i32) {
    %c0_i32 = arith.constant 0 : i32
    %c0_i32_0 = arith.constant 0 : i32
    %c0_i32_1 = arith.constant 0 : i32
    return %c0_i32, %c0_i32_0 : i32, i32
  }
  func.func @transform_2(%arg0: i32) -> (i32, i32) {
    %c0_i32 = arith.constant 0 : i32
    %c0_i32_0 = arith.constant 0 : i32
    %c0_i32_1 = arith.constant 0 : i32
    return %c0_i32, %c0_i32_0 : i32, i32
  }
  func.func @transform_3(%arg0: i32) -> (i32, i32) {
    %c0_i32 = arith.constant 0 : i32
    %c0_i32_0 = arith.constant 0 : i32
    %c0_i32_1 = arith.constant 0 : i32
    return %c0_i32, %c0_i32_0 : i32, i32
  }
  func.func @transform_4(%arg0: i32) -> (i32, i32) {
    %c0_i32 = arith.constant 0 : i32
    %c0_i32_0 = arith.constant 0 : i32
    %c0_i32_1 = arith.constant 0 : i32
    return %c0_i32, %c0_i32_0 : i32, i32
  }
  func.func @transform_5(%arg0: i32) -> (i32, i32) {
    %c0_i32 = arith.constant 0 : i32
    %c0_i32_0 = arith.constant 0 : i32
    %c0_i32_1 = arith.constant 0 : i32
    return %c0_i32, %c0_i32_0 : i32, i32
  }
  func.func @transform_6(%arg0: i32) -> (i32, i32) {
    %c0_i32 = arith.constant 0 : i32
    %c0_i32_0 = arith.constant 0 : i32
    %c0_i32_1 = arith.constant 0 : i32
    return %c0_i32, %c0_i32_0 : i32, i32
  }
  func.func @transform_7(%arg0: i32) -> (i32, i32) {
    %c0_i32 = arith.constant 0 : i32
    %c0_i32_0 = arith.constant 0 : i32
    return %arg0, %c0_i32 : i32, i32
  }
}

</mosaic_0001>

<llo_original>
// kernel: usps_mlp_forward.1
$region0: #{usps_mlp_forward.1}
  #allocation0 [shape = 'u32[]', space=smem, size = 0x4, offset = 0x4, fixed_abs, tag = 'smem constant byte address 0x4 - core index']
  #allocation1 [shape = 'u32[72,128]{1,0:T(1,128)}', space=vmem, size = 0x9000, scoped, tag = 'internal scratch']
  %s0 = inlined_call_operand.vmem [shape: f32[2,256], index: 0, kind: input, shape index: {}]
  %s1 = inlined_call_operand.hbm [shape: f32[256,640], index: 1, kind: input, shape index: {}]
  %s2 = inlined_call_operand.vmem [shape: f32[1,640], index: 2, kind: input, shape index: {}]
  %s3 = inlined_call_operand.hbm [shape: f32[640,128], index: 3, kind: input, shape index: {}]
  %s4 = inlined_call_operand.vmem [shape: f32[1,128], index: 4, kind: input, shape index: {}]
  %s5 = inlined_call_operand.hbm [shape: f32[128,128], index: 5, kind: input, shape index: {}]
  %s6 = inlined_call_operand.vmem [shape: f32[1,128], index: 6, kind: input, shape index: {}]
  %s7 = inlined_call_operand.hbm [shape: f32[2,128], index: 7, kind: output, shape index: {}]
  %s8 = sld [smem:[#allocation0]]
  $region50: #{usps_mlp_forward.1} parent=0
    _
  %s10 = ssub.s32 1, %s8
  %s11 = scalar_select 0, %s10, %s8
  $region1: #{usps_mlp_forward.1} parent=0
    #allocation2 [shape = 'u8[655360]{0}', space=vmem, size = 0xa0000, scoped, tag = 'input window, operand 1, single buffered']
    #allocation3 [shape = 's32[1]{0}', space=sflag, size = 0x4, scoped, tag = 'scoped memory for usps_mlp_forward.1']
    #allocation4 [shape = 's32[1]{0}', space=sflag, size = 0x4, scoped, tag = 'scoped memory for usps_mlp_forward.1']
    #allocation5 [shape = 'u8[327680]{0}', space=vmem, size = 0x50000, scoped, tag = 'input window, operand 3, single buffered']
    #allocation6 [shape = 's32[1]{0}', space=sflag, size = 0x4, scoped, tag = 'scoped memory for usps_mlp_forward.1']
    #allocation7 [shape = 'u8[65536]{0}', space=vmem, size = 0x10000, scoped, tag = 'input window, operand 5, single buffered']
    #allocation8 [shape = 'u8[1024]{0}', space=vmem, size = 0x400, scoped, tag = 'output window, operand 0, single buffered']
    %12 = vsyncpa [#allocation3], 0
    %13 = vsyncpa [#allocation6], 0
    %14 = vsyncpa [#allocation4], 0
    // Predicated region
    $region2: #{usps_mlp_forward.1} parent=1 // pred_check
      _
    $region3: #{usps_mlp_forward.1} parent=1 // pred_check_branch
      %16 = sbr.rel (0) target = $region5
    $region4: #{usps_mlp_forward.1} parent=1 // pred_region
      _
    $region5: #{usps_mlp_forward.1} parent=1 // pred_fallthru
      _
    // Predicated region
    $region6: #{usps_mlp_forward.1} parent=1 // pred_check
      _
    $region7: #{usps_mlp_forward.1} parent=1 // pred_check_branch
      %18 = sbr.rel (0) target = $region9
    $region8: #{usps_mlp_forward.1} parent=1 // pred_region
      %20 = vsyncadd [#allocation3], 0
      %s21 = sshll.u32 %s1, 4
      %s22 = int_to_ptr.hbm [resolvable:$true] %s21
      %s23 = sshll.u32 [#allocation2], 4
      %s24 = int_to_ptr.vmem [resolvable:$true] %s23
      %29 = dma.hbm_to_vmem [thread:$0]  %s22, 20480, %s24, [#allocation3], 640, 640, 40
    $region9: #{usps_mlp_forward.1} parent=1 // pred_fallthru
      _
    // Predicated region
    $region10: #{usps_mlp_forward.1} parent=1 // pred_check
      _
    $region11: #{usps_mlp_forward.1} parent=1 // pred_check_branch
      %31 = sbr.rel (0) target = $region13
    $region12: #{usps_mlp_forward.1} parent=1 // pred_region
      _
    $region13: #{usps_mlp_forward.1} parent=1 // pred_fallthru
      _
    // Predicated region
    $region14: #{usps_mlp_forward.1} parent=1 // pred_check
      _
    $region15: #{usps_mlp_forward.1} parent=1 // pred_check_branch
      %33 = sbr.rel (0) target = $region17
    $region16: #{usps_mlp_forward.1} parent=1 // pred_region
      %35 = vsyncadd [#allocation6], 0
      %s36 = sshll.u32 %s3, 4
      %s37 = int_to_ptr.hbm [resolvable:$true] %s36
      %s38 = sshll.u32 [#allocation5], 4
      %s39 = int_to_ptr.vmem [resolvable:$true] %s38
      %44 = dma.hbm_to_vmem [thread:$0]  %s37, 10240, %s39, [#allocation6], 128, 128, 8
    $region17: #{usps_mlp_forward.1} parent=1 // pred_fallthru
      _
    // Predicated region
    $region18: #{usps_mlp_forward.1} parent=1 // pred_check
      _
    $region19: #{usps_mlp_forward.1} parent=1 // pred_check_branch
      %46 = sbr.rel (0) target = $region21
    $region20: #{usps_mlp_forward.1} parent=1 // pred_region
      _
    $region21: #{usps_mlp_forward.1} parent=1 // pred_fallthru
      _
    // Predicated region
    $region22: #{usps_mlp_forward.1} parent=1 // pred_check
      _
    $region23: #{usps_mlp_forward.1} parent=1 // pred_check_branch
      %48 = sbr.rel (0) target = $region25
    $region24: #{usps_mlp_forward.1} parent=1 // pred_region
      %50 = vsyncadd [#allocation6], 0
      %s51 = sshll.u32 %s5, 4
      %s52 = int_to_ptr.hbm [resolvable:$true] %s51
      %s53 = sshll.u32 [#allocation7], 4
      %s54 = int_to_ptr.vmem [resolvable:$true] %s53
      %59 = dma.hbm_to_vmem [thread:$0]  %s52, 2048, %s54, [#allocation6], 128, 128, 8
    $region25: #{usps_mlp_forward.1} parent=1 // pred_fallthru
      _
    // Predicated region
    $region26: #{usps_mlp_forward.1} parent=1 // pred_check
      _
    $region27: #{usps_mlp_forward.1} parent=1 // pred_check_branch
      %61 = sbr.rel (0) target = $region29
    $region28: #{usps_mlp_forward.1} parent=1 // pred_region
      _
    $region29: #{usps_mlp_forward.1} parent=1 // pred_fallthru
      _
    // Predicated region
    $region30: #{usps_mlp_forward.1} parent=1 // pred_check
      _
    $region31: #{usps_mlp_forward.1} parent=1 // pred_check_branch
      %63 = sbr.rel (0) target = $region33
    $region32: #{usps_mlp_forward.1} parent=1 // pred_region
      %65 = dma.done [#allocation3], 20480
    $region33: #{usps_mlp_forward.1} parent=1 // pred_fallthru
      _
    // Predicated region
    $region34: #{usps_mlp_forward.1} parent=1 // pred_check
      _
    $region35: #{usps_mlp_forward.1} parent=1 // pred_check_branch
      %67 = sbr.rel (0) target = $region37
    $region36: #{usps_mlp_forward.1} parent=1 // pred_region
      %69 = dma.done [#allocation6], 10240
    $region37: #{usps_mlp_forward.1} parent=1 // pred_fallthru
      _
    // Predicated region
    $region38: #{usps_mlp_forward.1} parent=1 // pred_check
      _
    $region39: #{usps_mlp_forward.1} parent=1 // pred_check_branch
      %71 = sbr.rel (0) target = $region41
    $region40: #{usps_mlp_forward.1} parent=1 // pred_region
      %73 = dma.done [#allocation6], 2048
    $region41: #{usps_mlp_forward.1} parent=1 // pred_fallthru
      _
    %v74 = vld [vmem:[%s0] sm:$0xf]
    %v75 = vld [vmem:[#allocation2] sm:$0xff]
    %v76 = vld [vmem:[#allocation2 + $0x8] sm:$0xff]
    %v77 = vld [vmem:[#allocation2 + $0x10] sm:$0xff]
    %v78 = vld [vmem:[#allocation2 + $0x18] sm:$0xff]
    %v79 = vld [vmem:[#allocation2 + $0x20] sm:$0xff]
    %v80 = vld [vmem:[#allocation2 + $0x28] sm:$0xff]
    %v81 = vld [vmem:[#allocation2 + $0x30] sm:$0xff]
    %v82 = vld [vmem:[#allocation2 + $0x38] sm:$0xff]
    %v83 = vld [vmem:[#allocation2 + $0x40] sm:$0xff]
    %v84 = vld [vmem:[#allocation2 + $0x48] sm:$0xff]
    %v85 = vld [vmem:[#allocation2 + $0x50] sm:$0xff]
    %v86 = vld [vmem:[#allocation2 + $0x58] sm:$0xff]
    %v87 = vld [vmem:[#allocation2 + $0x60] sm:$0xff]
    %v88 = vld [vmem:[#allocation2 + $0x68] sm:$0xff]
    %v89 = vld [vmem:[#allocation2 + $0x70] sm:$0xff]
    %v90 = vld [vmem:[#allocation2 + $0x78] sm:$0xff]
    %v91 = vld [vmem:[#allocation2 + $0x80] sm:$0xff]
    %v92 = vld [vmem:[#allocation2 + $0x88] sm:$0xff]
    %v93 = vld [vmem:[#allocation2 + $0x90] sm:$0xff]
    %v94 = vld [vmem:[#allocation2 + $0x98] sm:$0xff]
    %v95 = vld [vmem:[#allocation2 + $0xa0] sm:$0xff]
    %v96 = vld [vmem:[#allocation2 + $0xa8] sm:$0xff]
    %v97 = vld [vmem:[#allocation2 + $0xb0] sm:$0xff]
    %v98 = vld [vmem:[#allocation2 + $0xb8] sm:$0xff]
    %v99 = vld [vmem:[#allocation2 + $0xc0] sm:$0xff]
    %v100 = vld [vmem:[#allocation2 + $0xc8] sm:$0xff]
    %v101 = vld [vmem:[#allocation2 + $0xd0] sm:$0xff]
    %v102 = vld [vmem:[#allocation2 + $0xd8] sm:$0xff]
    %v103 = vld [vmem:[#allocation2 + $0xe0] sm:$0xff]
    %v104 = vld [vmem:[#allocation2 + $0xe8] sm:$0xff]
    %v105 = vld [vmem:[#allocation2 + $0xf0] sm:$0xff]
    %v106 = vld [vmem:[#allocation2 + $0xf8] sm:$0xff]
    %v107 = vld [vmem:[#allocation2 + $0x100] sm:$0xff]
    %v108 = vld [vmem:[#allocation2 + $0x108] sm:$0xff]
    %v109 = vld [vmem:[#allocation2 + $0x110] sm:$0xff]
    %v110 = vld [vmem:[#allocation2 + $0x118] sm:$0xff]
    %v111 = vld [vmem:[#allocation2 + $0x120] sm:$0xff]
    %v112 = vld [vmem:[#allocation2 + $0x128] sm:$0xff]
    %v113 = vld [vmem:[#allocation2 + $0x130] sm:$0xff]
    %v114 = vld [vmem:[#allocation2 + $0x138] sm:$0xff]
    %v115 = vld [vmem:[#allocation2 + $0x140] sm:$0xff]
    %v116 = vld [vmem:[#allocation2 + $0x148] sm:$0xff]
    %v117 = vld [vmem:[#allocation2 + $0x150] sm:$0xff]
    %v118 = vld [vmem:[#allocation2 + $0x158] sm:$0xff]
    %v119 = vld [vmem:[#allocation2 + $0x160] sm:$0xff]
    %v120 = vld [vmem:[#allocation2 + $0x168] sm:$0xff]
    %v121 = vld [vmem:[#allocation2 + $0x170] sm:$0xff]
    %v122 = vld [vmem:[#allocation2 + $0x178] sm:$0xff]
    %v123 = vld [vmem:[#allocation2 + $0x180] sm:$0xff]
    %v124 = vld [vmem:[#allocation2 + $0x188] sm:$0xff]
    %v125 = vld [vmem:[#allocation2 + $0x190] sm:$0xff]
    %v126 = vld [vmem:[#allocation2 + $0x198] sm:$0xff]
    %v127 = vld [vmem:[#allocation2 + $0x1a0] sm:$0xff]
    %v128 = vld [vmem:[#allocation2 + $0x1a8] sm:$0xff]
    %v129 = vld [vmem:[#allocation2 + $0x1b0] sm:$0xff]
    %v130 = vld [vmem:[#allocation2 + $0x1b8] sm:$0xff]
    %v131 = vld [vmem:[#allocation2 + $0x1c0] sm:$0xff]
    %v132 = vld [vmem:[#allocation2 + $0x1c8] sm:$0xff]
    %v133 = vld [vmem:[#allocation2 + $0x1d0] sm:$0xff]
    %v134 = vld [vmem:[#allocation2 + $0x1d8] sm:$0xff]
    %v135 = vld [vmem:[#allocation2 + $0x1e0] sm:$0xff]
    %v136 = vld [vmem:[#allocation2 + $0x1e8] sm:$0xff]
    %v137 = vld [vmem:[#allocation2 + $0x1f0] sm:$0xff]
    %v138 = vld [vmem:[#allocation2 + $0x1f8] sm:$0xff]
    %v139 = vld [vmem:[#allocation2 + $0x200] sm:$0xff]
    %v140 = vld [vmem:[#allocation2 + $0x208] sm:$0xff]
    %v141 = vld [vmem:[#allocation2 + $0x210] sm:$0xff]
    %v142 = vld [vmem:[#allocation2 + $0x218] sm:$0xff]
    %v143 = vld [vmem:[#allocation2 + $0x220] sm:$0xff]
    %v144 = vld [vmem:[#allocation2 + $0x228] sm:$0xff]
    %v145 = vld [vmem:[#allocation2 + $0x230] sm:$0xff]
    %v146 = vld [vmem:[#allocation2 + $0x238] sm:$0xff]
    %v147 = vld [vmem:[#allocation2 + $0x240] sm:$0xff]
    %v148 = vld [vmem:[#allocation2 + $0x248] sm:$0xff]
    %v149 = vld [vmem:[#allocation2 + $0x250] sm:$0xff]
    %v150 = vld [vmem:[#allocation2 + $0x258] sm:$0xff]
    %v151 = vld [vmem:[#allocation2 + $0x260] sm:$0xff]
    %v152 = vld [vmem:[#allocation2 + $0x268] sm:$0xff]
    %v153 = vld [vmem:[#allocation2 + $0x270] sm:$0xff]
    %v154 = vld [vmem:[#allocation2 + $0x278] sm:$0xff]
    %v155 = vld [vmem:[#allocation2 + $0x280] sm:$0xff]
    %v156 = vld [vmem:[#allocation2 + $0x288] sm:$0xff]
    %v157 = vld [vmem:[#allocation2 + $0x290] sm:$0xff]
    %v158 = vld [vmem:[#allocation2 + $0x298] sm:$0xff]
    %v159 = vld [vmem:[#allocation2 + $0x2a0] sm:$0xff]
    %v160 = vld [vmem:[#allocation2 + $0x2a8] sm:$0xff]
    %v161 = vld [vmem:[#allocation2 + $0x2b0] sm:$0xff]
    %v162 = vld [vmem:[#allocation2 + $0x2b8] sm:$0xff]
    %v163 = vld [vmem:[#allocation2 + $0x2c0] sm:$0xff]
    %v164 = vld [vmem:[#allocation2 + $0x2c8] sm:$0xff]
    %v165 = vld [vmem:[#allocation2 + $0x2d0] sm:$0xff]
    %v166 = vld [vmem:[#allocation2 + $0x2d8] sm:$0xff]
    %v167 = vld [vmem:[#allocation2 + $0x2e0] sm:$0xff]
    %v168 = vld [vmem:[#allocation2 + $0x2e8] sm:$0xff]
    %v169 = vld [vmem:[#allocation2 + $0x2f0] sm:$0xff]
    %v170 = vld [vmem:[#allocation2 + $0x2f8] sm:$0xff]
    %v171 = vld [vmem:[#allocation2 + $0x300] sm:$0xff]
    %v172 = vld [vmem:[#allocation2 + $0x308] sm:$0xff]
    %v173 = vld [vmem:[#allocation2 + $0x310] sm:$0xff]
    %v174 = vld [vmem:[#allocation2 + $0x318] sm:$0xff]
    %v175 = vld [vmem:[#allocation2 + $0x320] sm:$0xff]
    %v176 = vld [vmem:[#allocation2 + $0x328] sm:$0xff]
    %v177 = vld [vmem:[#allocation2 + $0x330] sm:$0xff]
    %v178 = vld [vmem:[#allocation2 + $0x338] sm:$0xff]
    %v179 = vld [vmem:[#allocation2 + $0x340] sm:$0xff]
    %v180 = vld [vmem:[#allocation2 + $0x348] sm:$0xff]
    %v181 = vld [vmem:[#allocation2 + $0x350] sm:$0xff]
    %v182 = vld [vmem:[#allocation2 + $0x358] sm:$0xff]
    %v183 = vld [vmem:[#allocation2 + $0x360] sm:$0xff]
    %v184 = vld [vmem:[#allocation2 + $0x368] sm:$0xff]
    %v185 = vld [vmem:[#allocation2 + $0x370] sm:$0xff]
    %v186 = vld [vmem:[#allocation2 + $0x378] sm:$0xff]
    %v187 = vld [vmem:[#allocation2 + $0x380] sm:$0xff]
    %v188 = vld [vmem:[#allocation2 + $0x388] sm:$0xff]
    %v189 = vld [vmem:[#allocation2 + $0x390] sm:$0xff]
    %v190 = vld [vmem:[#allocation2 + $0x398] sm:$0xff]
    %v191 = vld [vmem:[#allocation2 + $0x3a0] sm:$0xff]
    %v192 = vld [vmem:[#allocation2 + $0x3a8] sm:$0xff]
    %v193 = vld [vmem:[#allocation2 + $0x3b0] sm:$0xff]
    %v194 = vld [vmem:[#allocation2 + $0x3b8] sm:$0xff]
    %v195 = vld [vmem:[#allocation2 + $0x3c0] sm:$0xff]
    %v196 = vld [vmem:[#allocation2 + $0x3c8] sm:$0xff]
    %v197 = vld [vmem:[#allocation2 + $0x3d0] sm:$0xff]
    %v198 = vld [vmem:[#allocation2 + $0x3d8] sm:$0xff]
    %v199 = vld [vmem:[#allocation2 + $0x3e0] sm:$0xff]
    %v200 = vld [vmem:[#allocation2 + $0x3e8] sm:$0xff]
    %v201 = vld [vmem:[#allocation2 + $0x3f0] sm:$0xff]
    %v202 = vld [vmem:[#allocation2 + $0x3f8] sm:$0xff]
    %v203 = vld [vmem:[#allocation2 + $0x400] sm:$0xff]
    %v204 = vld [vmem:[#allocation2 + $0x408] sm:$0xff]
    %v205 = vld [vmem:[#allocation2 + $0x410] sm:$0xff]
    %v206 = vld [vmem:[#allocation2 + $0x418] sm:$0xff]
    %v207 = vld [vmem:[#allocation2 + $0x420] sm:$0xff]
    %v208 = vld [vmem:[#allocation2 + $0x428] sm:$0xff]
    %v209 = vld [vmem:[#allocation2 + $0x430] sm:$0xff]
    %v210 = vld [vmem:[#allocation2 + $0x438] sm:$0xff]
    %v211 = vld [vmem:[#allocation2 + $0x440] sm:$0xff]
    %v212 = vld [vmem:[#allocation2 + $0x448] sm:$0xff]
    %v213 = vld [vmem:[#allocation2 + $0x450] sm:$0xff]
    %v214 = vld [vmem:[#allocation2 + $0x458] sm:$0xff]
    %v215 = vld [vmem:[#allocation2 + $0x460] sm:$0xff]
    %v216 = vld [vmem:[#allocation2 + $0x468] sm:$0xff]
    %v217 = vld [vmem:[#allocation2 + $0x470] sm:$0xff]
    %v218 = vld [vmem:[#allocation2 + $0x478] sm:$0xff]
    %v219 = vld [vmem:[#allocation2 + $0x480] sm:$0xff]
    %v220 = vld [vmem:[#allocation2 + $0x488] sm:$0xff]
    %v221 = vld [vmem:[#allocation2 + $0x490] sm:$0xff]
    %v222 = vld [vmem:[#allocation2 + $0x498] sm:$0xff]
    %v223 = vld [vmem:[#allocation2 + $0x4a0] sm:$0xff]
    %v224 = vld [vmem:[#allocation2 + $0x4a8] sm:$0xff]
    %v225 = vld [vmem:[#allocation2 + $0x4b0] sm:$0xff]
    %v226 = vld [vmem:[#allocation2 + $0x4b8] sm:$0xff]
    %v227 = vld [vmem:[#allocation2 + $0x4c0] sm:$0xff]
    %v228 = vld [vmem:[#allocation2 + $0x4c8] sm:$0xff]
    %v229 = vld [vmem:[#allocation2 + $0x4d0] sm:$0xff]
    %v230 = vld [vmem:[#allocation2 + $0x4d8] sm:$0xff]
    %v231 = vld [vmem:[#allocation2 + $0x4e0] sm:$0xff]
    %v232 = vld [vmem:[#allocation2 + $0x4e8] sm:$0xff]
    %v233 = vld [vmem:[#allocation2 + $0x4f0] sm:$0xff]
    %v234 = vld [vmem:[#allocation2 + $0x4f8] sm:$0xff]
    %v235 = vld [vmem:[%s2] sm:$0x1f]
    %v237 = vperm.slane %v235, 0
    %v238 = vperm.slane %v235, 1
    %v239 = vperm.slane %v235, 2
    %v240 = vperm.slane %v235, 3
    %v241 = vperm.slane %v235, 4
    %248 = vst [vmem:[#allocation1] ss:$4 sm:$0xff] %v74
    %v249 = vld.sshfl [vmem:[#allocation1] sm:$0xff pattern:$0x73625140]
    %v250 = vld.sshfl [vmem:[#allocation1 + $0x8] sm:$0xff pattern:$0x73625140]
    %253 = vmatpush.msra.mxu0 %v150
    %254 = vmatpush.msra.mxu0 %v145
    %255 = vmatpush.msra.mxu0 %v140
    %256 = vmatpush.msra.mxu0 %v135
    %257 = vmatpush.msra.mxu0 %v130
    %258 = vmatpush.msra.mxu0 %v125
    %259 = vmatpush.msra.mxu0 %v120
    %260 = vmatpush.msra.mxu0 %v115
    %261 = vmatpush.msra.mxu0 %v110
    %262 = vmatpush.msra.mxu0 %v105
    %263 = vmatpush.msra.mxu0 %v100
    %264 = vmatpush.msra.mxu0 %v95
    %265 = vmatpush.msra.mxu0 %v90
    %266 = vmatpush.msra.mxu0 %v85
    %267 = vmatpush.msra.mxu0 %v80
    %268 = vmatpush.msra.mxu0 %v75
    %269 = vmatmul.f32.gmra.mxu0 %v249
    %v270 = vpop.f32.mrf.mxu0
    %v271 = vadd.f32 %v237, %v270
    %272 = vdwg.mxu0
    %273 = vmatpush.msra.mxu0 %v230
    %274 = vmatpush.msra.mxu0 %v225
    %275 = vmatpush.msra.mxu0 %v220
    %276 = vmatpush.msra.mxu0 %v215
    %277 = vmatpush.msra.mxu0 %v210
    %278 = vmatpush.msra.mxu0 %v205
    %279 = vmatpush.msra.mxu0 %v200
    %280 = vmatpush.msra.mxu0 %v195
    %281 = vmatpush.msra.mxu0 %v190
    %282 = vmatpush.msra.mxu0 %v185
    %283 = vmatpush.msra.mxu0 %v180
    %284 = vmatpush.msra.mxu0 %v175
    %285 = vmatpush.msra.mxu0 %v170
    %286 = vmatpush.msra.mxu0 %v165
    %287 = vmatpush.msra.mxu0 %v160
    %288 = vmatpush.msra.mxu0 %v155
    %289 = vmatmul.f32.gmra.mxu0 %v250
    %v290 = vpop.f32.mrf.mxu0
    %v291 = vadd.f32 %v271, %v290
    %292 = vdwg.mxu0
    %293 = vmatpush.msra.mxu0 %v151
    %294 = vmatpush.msra.mxu0 %v146
    %295 = vmatpush.msra.mxu0 %v141
    %296 = vmatpush.msra.mxu0 %v136
    %297 = vmatpush.msra.mxu0 %v131
    %298 = vmatpush.msra.mxu0 %v126
    %299 = vmatpush.msra.mxu0 %v121
    %300 = vmatpush.msra.mxu0 %v116
    %301 = vmatpush.msra.mxu0 %v111
    %302 = vmatpush.msra.mxu0 %v106
    %303 = vmatpush.msra.mxu0 %v101
    %304 = vmatpush.msra.mxu0 %v96
    %305 = vmatpush.msra.mxu0 %v91
    %306 = vmatpush.msra.mxu0 %v86
    %307 = vmatpush.msra.mxu0 %v81
    %308 = vmatpush.msra.mxu0 %v76
    %309 = vmatmul.f32.gmra.mxu0 %v249
    %v310 = vpop.f32.mrf.mxu0
    %v311 = vadd.f32 %v238, %v310
    %312 = vdwg.mxu0
    %313 = vmatpush.msra.mxu0 %v231
    %314 = vmatpush.msra.mxu0 %v226
    %315 = vmatpush.msra.mxu0 %v221
    %316 = vmatpush.msra.mxu0 %v216
    %317 = vmatpush.msra.mxu0 %v211
    %318 = vmatpush.msra.mxu0 %v206
    %319 = vmatpush.msra.mxu0 %v201
    %320 = vmatpush.msra.mxu0 %v196
    %321 = vmatpush.msra.mxu0 %v191
    %322 = vmatpush.msra.mxu0 %v186
    %323 = vmatpush.msra.mxu0 %v181
    %324 = vmatpush.msra.mxu0 %v176
    %325 = vmatpush.msra.mxu0 %v171
    %326 = vmatpush.msra.mxu0 %v166
    %327 = vmatpush.msra.mxu0 %v161
    %328 = vmatpush.msra.mxu0 %v156
    %329 = vmatmul.f32.gmra.mxu0 %v250
    %v330 = vpop.f32.mrf.mxu0
    %v331 = vadd.f32 %v311, %v330
    %332 = vdwg.mxu0
    %333 = vmatpush.msra.mxu0 %v152
    %334 = vmatpush.msra.mxu0 %v147
    %335 = vmatpush.msra.mxu0 %v142
    %336 = vmatpush.msra.mxu0 %v137
    %337 = vmatpush.msra.mxu0 %v132
    %338 = vmatpush.msra.mxu0 %v127
    %339 = vmatpush.msra.mxu0 %v122
    %340 = vmatpush.msra.mxu0 %v117
    %341 = vmatpush.msra.mxu0 %v112
    %342 = vmatpush.msra.mxu0 %v107
    %343 = vmatpush.msra.mxu0 %v102
    %344 = vmatpush.msra.mxu0 %v97
    %345 = vmatpush.msra.mxu0 %v92
    %346 = vmatpush.msra.mxu0 %v87
    %347 = vmatpush.msra.mxu0 %v82
    %348 = vmatpush.msra.mxu0 %v77
    %349 = vmatmul.f32.gmra.mxu0 %v249
    %v350 = vpop.f32.mrf.mxu0
    %v351 = vadd.f32 %v239, %v350
    %352 = vdwg.mxu0
    %353 = vmatpush.msra.mxu0 %v232
    %354 = vmatpush.msra.mxu0 %v227
    %355 = vmatpush.msra.mxu0 %v222
    %356 = vmatpush.msra.mxu0 %v217
    %357 = vmatpush.msra.mxu0 %v212
    %358 = vmatpush.msra.mxu0 %v207
    %359 = vmatpush.msra.mxu0 %v202
    %360 = vmatpush.msra.mxu0 %v197
    %361 = vmatpush.msra.mxu0 %v192
    %362 = vmatpush.msra.mxu0 %v187
    %363 = vmatpush.msra.mxu0 %v182
    %364 = vmatpush.msra.mxu0 %v177
    %365 = vmatpush.msra.mxu0 %v172
    %366 = vmatpush.msra.mxu0 %v167
    %367 = vmatpush.msra.mxu0 %v162
    %368 = vmatpush.msra.mxu0 %v157
    %369 = vmatmul.f32.gmra.mxu0 %v250
    %v370 = vpop.f32.mrf.mxu0
    %v371 = vadd.f32 %v351, %v370
    %372 = vdwg.mxu0
    %373 = vmatpush.msra.mxu0 %v153
    %374 = vmatpush.msra.mxu0 %v148
    %375 = vmatpush.msra.mxu0 %v143
    %376 = vmatpush.msra.mxu0 %v138
    %377 = vmatpush.msra.mxu0 %v133
    %378 = vmatpush.msra.mxu0 %v128
    %379 = vmatpush.msra.mxu0 %v123
    %380 = vmatpush.msra.mxu0 %v118
    %381 = vmatpush.msra.mxu0 %v113
    %382 = vmatpush.msra.mxu0 %v108
    %383 = vmatpush.msra.mxu0 %v103
    %384 = vmatpush.msra.mxu0 %v98
    %385 = vmatpush.msra.mxu0 %v93
    %386 = vmatpush.msra.mxu0 %v88
    %387 = vmatpush.msra.mxu0 %v83
    %388 = vmatpush.msra.mxu0 %v78
    %389 = vmatmul.f32.gmra.mxu0 %v249
    %v390 = vpop.f32.mrf.mxu0
    %v391 = vadd.f32 %v240, %v390
    %392 = vdwg.mxu0
    %393 = vmatpush.msra.mxu0 %v233
    %394 = vmatpush.msra.mxu0 %v228
    %395 = vmatpush.msra.mxu0 %v223
    %396 = vmatpush.msra.mxu0 %v218
    %397 = vmatpush.msra.mxu0 %v213
    %398 = vmatpush.msra.mxu0 %v208
    %399 = vmatpush.msra.mxu0 %v203
    %400 = vmatpush.msra.mxu0 %v198
    %401 = vmatpush.msra.mxu0 %v193
    %402 = vmatpush.msra.mxu0 %v188
    %403 = vmatpush.msra.mxu0 %v183
    %404 = vmatpush.msra.mxu0 %v178
    %405 = vmatpush.msra.mxu0 %v173
    %406 = vmatpush.msra.mxu0 %v168
    %407 = vmatpush.msra.mxu0 %v163
    %408 = vmatpush.msra.mxu0 %v158
    %409 = vmatmul.f32.gmra.mxu0 %v250
    %v410 = vpop.f32.mrf.mxu0
    %v411 = vadd.f32 %v391, %v410
    %412 = vdwg.mxu0
    %413 = vmatpush.msra.mxu0 %v154
    %414 = vmatpush.msra.mxu0 %v149
    %415 = vmatpush.msra.mxu0 %v144
    %416 = vmatpush.msra.mxu0 %v139
    %417 = vmatpush.msra.mxu0 %v134
    %418 = vmatpush.msra.mxu0 %v129
    %419 = vmatpush.msra.mxu0 %v124
    %420 = vmatpush.msra.mxu0 %v119
    %421 = vmatpush.msra.mxu0 %v114
    %422 = vmatpush.msra.mxu0 %v109
    %423 = vmatpush.msra.mxu0 %v104
    %424 = vmatpush.msra.mxu0 %v99
    %425 = vmatpush.msra.mxu0 %v94
    %426 = vmatpush.msra.mxu0 %v89
    %427 = vmatpush.msra.mxu0 %v84
    %428 = vmatpush.msra.mxu0 %v79
    %429 = vmatmul.f32.gmra.mxu0 %v249
    %v430 = vpop.f32.mrf.mxu0
    %v431 = vadd.f32 %v241, %v430
    %432 = vdwg.mxu0
    %433 = vmatpush.msra.mxu0 %v234
    %434 = vmatpush.msra.mxu0 %v229
    %435 = vmatpush.msra.mxu0 %v224
    %436 = vmatpush.msra.mxu0 %v219
    %437 = vmatpush.msra.mxu0 %v214
    %438 = vmatpush.msra.mxu0 %v209
    %439 = vmatpush.msra.mxu0 %v204
    %440 = vmatpush.msra.mxu0 %v199
    %441 = vmatpush.msra.mxu0 %v194
    %442 = vmatpush.msra.mxu0 %v189
    %443 = vmatpush.msra.mxu0 %v184
    %444 = vmatpush.msra.mxu0 %v179
    %445 = vmatpush.msra.mxu0 %v174
    %446 = vmatpush.msra.mxu0 %v169
    %447 = vmatpush.msra.mxu0 %v164
    %448 = vmatpush.msra.mxu0 %v159
    %449 = vmatmul.f32.gmra.mxu0 %v250
    %v450 = vpop.f32.mrf.mxu0
    %v451 = vadd.f32 %v431, %v450
    %452 = vdwg.mxu0
    %v453 = vmax.f32 %v291, 0.0
    %v454 = vmax.f32 %v331, 0.0
    %v455 = vmax.f32 %v371, 0.0
    %v456 = vmax.f32 %v411, 0.0
    %v457 = vmax.f32 %v451, 0.0
    %v458 = vld [vmem:[#allocation5] sm:$0xff]
    %v459 = vld [vmem:[#allocation5 + $0x8] sm:$0xff]
    %v460 = vld [vmem:[#allocation5 + $0x10] sm:$0xff]
    %v461 = vld [vmem:[#allocation5 + $0x18] sm:$0xff]
    %v462 = vld [vmem:[#allocation5 + $0x20] sm:$0xff]
    %v463 = vld [vmem:[#allocation5 + $0x28] sm:$0xff]
    %v464 = vld [vmem:[#allocation5 + $0x30] sm:$0xff]
    %v465 = vld [vmem:[#allocation5 + $0x38] sm:$0xff]
    %v466 = vld [vmem:[#allocation5 + $0x40] sm:$0xff]
    %v467 = vld [vmem:[#allocation5 + $0x48] sm:$0xff]
    %v468 = vld [vmem:[#allocation5 + $0x50] sm:$0xff]
    %v469 = vld [vmem:[#allocation5 + $0x58] sm:$0xff]
    %v470 = vld [vmem:[#allocation5 + $0x60] sm:$0xff]
    %v471 = vld [vmem:[#allocation5 + $0x68] sm:$0xff]
    %v472 = vld [vmem:[#allocation5 + $0x70] sm:$0xff]
    %v473 = vld [vmem:[#allocation5 + $0x78] sm:$0xff]
    %v474 = vld [vmem:[#allocation5 + $0x80] sm:$0xff]
    %v475 = vld [vmem:[#allocation5 + $0x88] sm:$0xff]
    %v476 = vld [vmem:[#allocation5 + $0x90] sm:$0xff]
    %v477 = vld [vmem:[#allocation5 + $0x98] sm:$0xff]
    %v478 = vld [vmem:[#allocation5 + $0xa0] sm:$0xff]
    %v479 = vld [vmem:[#allocation5 + $0xa8] sm:$0xff]
    %v480 = vld [vmem:[#allocation5 + $0xb0] sm:$0xff]
    %v481 = vld [vmem:[#allocation5 + $0xb8] sm:$0xff]
    %v482 = vld [vmem:[#allocation5 + $0xc0] sm:$0xff]
    %v483 = vld [vmem:[#allocation5 + $0xc8] sm:$0xff]
    %v484 = vld [vmem:[#allocation5 + $0xd0] sm:$0xff]
    %v485 = vld [vmem:[#allocation5 + $0xd8] sm:$0xff]
    %v486 = vld [vmem:[#allocation5 + $0xe0] sm:$0xff]
    %v487 = vld [vmem:[#allocation5 + $0xe8] sm:$0xff]
    %v488 = vld [vmem:[#allocation5 + $0xf0] sm:$0xff]
    %v489 = vld [vmem:[#allocation5 + $0xf8] sm:$0xff]
    %v490 = vld [vmem:[#allocation5 + $0x100] sm:$0xff]
    %v491 = vld [vmem:[#allocation5 + $0x108] sm:$0xff]
    %v492 = vld [vmem:[#allocation5 + $0x110] sm:$0xff]
    %v493 = vld [vmem:[#allocation5 + $0x118] sm:$0xff]
    %v494 = vld [vmem:[#allocation5 + $0x120] sm:$0xff]
    %v495 = vld [vmem:[#allocation5 + $0x128] sm:$0xff]
    %v496 = vld [vmem:[#allocation5 + $0x130] sm:$0xff]
    %v497 = vld [vmem:[#allocation5 + $0x138] sm:$0xff]
    %v498 = vld [vmem:[#allocation5 + $0x140] sm:$0xff]
    %v499 = vld [vmem:[#allocation5 + $0x148] sm:$0xff]
    %v500 = vld [vmem:[#allocation5 + $0x150] sm:$0xff]
    %v501 = vld [vmem:[#allocation5 + $0x158] sm:$0xff]
    %v502 = vld [vmem:[#allocation5 + $0x160] sm:$0xff]
    %v503 = vld [vmem:[#allocation5 + $0x168] sm:$0xff]
    %v504 = vld [vmem:[#allocation5 + $0x170] sm:$0xff]
    %v505 = vld [vmem:[#allocation5 + $0x178] sm:$0xff]
    %v506 = vld [vmem:[#allocation5 + $0x180] sm:$0xff]
    %v507 = vld [vmem:[#allocation5 + $0x188] sm:$0xff]
    %v508 = vld [vmem:[#allocation5 + $0x190] sm:$0xff]
    %v509 = vld [vmem:[#allocation5 + $0x198] sm:$0xff]
    %v510 = vld [vmem:[#allocation5 + $0x1a0] sm:$0xff]
    %v511 = vld [vmem:[#allocation5 + $0x1a8] sm:$0xff]
    %v512 = vld [vmem:[#allocation5 + $0x1b0] sm:$0xff]
    %v513 = vld [vmem:[#allocation5 + $0x1b8] sm:$0xff]
    %v514 = vld [vmem:[#allocation5 + $0x1c0] sm:$0xff]
    %v515 = vld [vmem:[#allocation5 + $0x1c8] sm:$0xff]
    %v516 = vld [vmem:[#allocation5 + $0x1d0] sm:$0xff]
    %v517 = vld [vmem:[#allocation5 + $0x1d8] sm:$0xff]
    %v518 = vld [vmem:[#allocation5 + $0x1e0] sm:$0xff]
    %v519 = vld [vmem:[#allocation5 + $0x1e8] sm:$0xff]
    %v520 = vld [vmem:[#allocation5 + $0x1f0] sm:$0xff]
    %v521 = vld [vmem:[#allocation5 + $0x1f8] sm:$0xff]
    %v522 = vld [vmem:[#allocation5 + $0x200] sm:$0xff]
    %v523 = vld [vmem:[#allocation5 + $0x208] sm:$0xff]
    %v524 = vld [vmem:[#allocation5 + $0x210] sm:$0xff]
    %v525 = vld [vmem:[#allocation5 + $0x218] sm:$0xff]
    %v526 = vld [vmem:[#allocation5 + $0x220] sm:$0xff]
    %v527 = vld [vmem:[#allocation5 + $0x228] sm:$0xff]
    %v528 = vld [vmem:[#allocation5 + $0x230] sm:$0xff]
    %v529 = vld [vmem:[#allocation5 + $0x238] sm:$0xff]
    %v530 = vld [vmem:[#allocation5 + $0x240] sm:$0xff]
    %v531 = vld [vmem:[#allocation5 + $0x248] sm:$0xff]
    %v532 = vld [vmem:[#allocation5 + $0x250] sm:$0xff]
    %v533 = vld [vmem:[#allocation5 + $0x258] sm:$0xff]
    %v534 = vld [vmem:[#allocation5 + $0x260] sm:$0xff]
    %v535 = vld [vmem:[#allocation5 + $0x268] sm:$0xff]
    %v536 = vld [vmem:[#allocation5 + $0x270] sm:$0xff]
    %v537 = vld [vmem:[#allocation5 + $0x278] sm:$0xff]
    %v538 = vld [vmem:[%s4] sm:$0x1]
    %v540 = vperm.slane %v538, 0
    %542 = vmatpush.msra.mxu0 %v473
    %543 = vmatpush.msra.mxu0 %v472
    %544 = vmatpush.msra.mxu0 %v471
    %545 = vmatpush.msra.mxu0 %v470
    %546 = vmatpush.msra.mxu0 %v469
    %547 = vmatpush.msra.mxu0 %v468
    %548 = vmatpush.msra.mxu0 %v467
    %549 = vmatpush.msra.mxu0 %v466
    %550 = vmatpush.msra.mxu0 %v465
    %551 = vmatpush.msra.mxu0 %v464
    %552 = vmatpush.msra.mxu0 %v463
    %553 = vmatpush.msra.mxu0 %v462
    %554 = vmatpush.msra.mxu0 %v461
    %555 = vmatpush.msra.mxu0 %v460
    %556 = vmatpush.msra.mxu0 %v459
    %557 = vmatpush.msra.mxu0 %v458
    %558 = vmatmul.f32.gmra.mxu0 %v453
    %v559 = vpop.f32.mrf.mxu0
    %v560 = vadd.f32 %v540, %v559
    %561 = vdwg.mxu0
    %562 = vmatpush.msra.mxu0 %v489
    %563 = vmatpush.msra.mxu0 %v488
    %564 = vmatpush.msra.mxu0 %v487
    %565 = vmatpush.msra.mxu0 %v486
    %566 = vmatpush.msra.mxu0 %v485
    %567 = vmatpush.msra.mxu0 %v484
    %568 = vmatpush.msra.mxu0 %v483
    %569 = vmatpush.msra.mxu0 %v482
    %570 = vmatpush.msra.mxu0 %v481
    %571 = vmatpush.msra.mxu0 %v480
    %572 = vmatpush.msra.mxu0 %v479
    %573 = vmatpush.msra.mxu0 %v478
    %574 = vmatpush.msra.mxu0 %v477
    %575 = vmatpush.msra.mxu0 %v476
    %576 = vmatpush.msra.mxu0 %v475
    %577 = vmatpush.msra.mxu0 %v474
    %578 = vmatmul.f32.gmra.mxu0 %v454
    %v579 = vpop.f32.mrf.mxu0
    %v580 = vadd.f32 %v560, %v579
    %581 = vdwg.mxu0
    %582 = vmatpush.msra.mxu0 %v505
    %583 = vmatpush.msra.mxu0 %v504
    %584 = vmatpush.msra.mxu0 %v503
    %585 = vmatpush.msra.mxu0 %v502
    %586 = vmatpush.msra.mxu0 %v501
    %587 = vmatpush.msra.mxu0 %v500
    %588 = vmatpush.msra.mxu0 %v499
    %589 = vmatpush.msra.mxu0 %v498
    %590 = vmatpush.msra.mxu0 %v497
    %591 = vmatpush.msra.mxu0 %v496
    %592 = vmatpush.msra.mxu0 %v495
    %593 = vmatpush.msra.mxu0 %v494
    %594 = vmatpush.msra.mxu0 %v493
    %595 = vmatpush.msra.mxu0 %v492
    %596 = vmatpush.msra.mxu0 %v491
    %597 = vmatpush.msra.mxu0 %v490
    %598 = vmatmul.f32.gmra.mxu0 %v455
    %v599 = vpop.f32.mrf.mxu0
    %v600 = vadd.f32 %v580, %v599
    %601 = vdwg.mxu0
    %602 = vmatpush.msra.mxu0 %v521
    %603 = vmatpush.msra.mxu0 %v520
    %604 = vmatpush.msra.mxu0 %v519
    %605 = vmatpush.msra.mxu0 %v518
    %606 = vmatpush.msra.mxu0 %v517
    %607 = vmatpush.msra.mxu0 %v516
    %608 = vmatpush.msra.mxu0 %v515
    %609 = vmatpush.msra.mxu0 %v514
    %610 = vmatpush.msra.mxu0 %v513
    %611 = vmatpush.msra.mxu0 %v512
    %612 = vmatpush.msra.mxu0 %v511
    %613 = vmatpush.msra.mxu0 %v510
    %614 = vmatpush.msra.mxu0 %v509
    %615 = vmatpush.msra.mxu0 %v508
    %616 = vmatpush.msra.mxu0 %v507
    %617 = vmatpush.msra.mxu0 %v506
    %618 = vmatmul.f32.gmra.mxu0 %v456
    %v619 = vpop.f32.mrf.mxu0
    %v620 = vadd.f32 %v600, %v619
    %621 = vdwg.mxu0
    %622 = vmatpush.msra.mxu0 %v537
    %623 = vmatpush.msra.mxu0 %v536
    %624 = vmatpush.msra.mxu0 %v535
    %625 = vmatpush.msra.mxu0 %v534
    %626 = vmatpush.msra.mxu0 %v533
    %627 = vmatpush.msra.mxu0 %v532
    %628 = vmatpush.msra.mxu0 %v531
    %629 = vmatpush.msra.mxu0 %v530
    %630 = vmatpush.msra.mxu0 %v529
    %631 = vmatpush.msra.mxu0 %v528
    %632 = vmatpush.msra.mxu0 %v527
    %633 = vmatpush.msra.mxu0 %v526
    %634 = vmatpush.msra.mxu0 %v525
    %635 = vmatpush.msra.mxu0 %v524
    %636 = vmatpush.msra.mxu0 %v523
    %637 = vmatpush.msra.mxu0 %v522
    %638 = vmatmul.f32.gmra.mxu0 %v457
    %v639 = vpop.f32.mrf.mxu0
    %v640 = vadd.f32 %v620, %v639
    %641 = vdwg.mxu0
    %v642 = vmax.f32 %v640, 0.0
    %v643 = vld [vmem:[#allocation7] sm:$0xff]
    %v644 = vld [vmem:[#allocation7 + $0x8] sm:$0xff]
    %v645 = vld [vmem:[#allocation7 + $0x10] sm:$0xff]
    %v646 = vld [vmem:[#allocation7 + $0x18] sm:$0xff]
    %v647 = vld [vmem:[#allocation7 + $0x20] sm:$0xff]
    %v648 = vld [vmem:[#allocation7 + $0x28] sm:$0xff]
    %v649 = vld [vmem:[#allocation7 + $0x30] sm:$0xff]
    %v650 = vld [vmem:[#allocation7 + $0x38] sm:$0xff]
    %v651 = vld [vmem:[#allocation7 + $0x40] sm:$0xff]
    %v652 = vld [vmem:[#allocation7 + $0x48] sm:$0xff]
    %v653 = vld [vmem:[#allocation7 + $0x50] sm:$0xff]
    %v654 = vld [vmem:[#allocation7 + $0x58] sm:$0xff]
    %v655 = vld [vmem:[#allocation7 + $0x60] sm:$0xff]
    %v656 = vld [vmem:[#allocation7 + $0x68] sm:$0xff]
    %v657 = vld [vmem:[#allocation7 + $0x70] sm:$0xff]
    %v658 = vld [vmem:[#allocation7 + $0x78] sm:$0xff]
    %v659 = vld [vmem:[%s6] sm:$0x1]
    %v661 = vperm.slane %v659, 0
    %663 = vmatpush.msra.mxu0 %v658
    %664 = vmatpush.msra.mxu0 %v657
    %665 = vmatpush.msra.mxu0 %v656
    %666 = vmatpush.msra.mxu0 %v655
    %667 = vmatpush.msra.mxu0 %v654
    %668 = vmatpush.msra.mxu0 %v653
    %669 = vmatpush.msra.mxu0 %v652
    %670 = vmatpush.msra.mxu0 %v651
    %671 = vmatpush.msra.mxu0 %v650
    %672 = vmatpush.msra.mxu0 %v649
    %673 = vmatpush.msra.mxu0 %v648
    %674 = vmatpush.msra.mxu0 %v647
    %675 = vmatpush.msra.mxu0 %v646
    %676 = vmatpush.msra.mxu0 %v645
    %677 = vmatpush.msra.mxu0 %v644
    %678 = vmatpush.msra.mxu0 %v643
    %679 = vmatmul.f32.gmra.mxu0 %v642
    %v680 = vpop.f32.mrf.mxu0
    %v681 = vadd.f32 %v661, %v680
    %682 = vdwg.mxu0
    %683 = vst [vmem:[#allocation8] sm:$0x3] %v681
    // Predicated region
    $region42: #{usps_mlp_forward.1} parent=1 // pred_check
      _
    $region43: #{usps_mlp_forward.1} parent=1 // pred_check_branch
      %685 = sbr.rel (0) target = $region45
    $region44: #{usps_mlp_forward.1} parent=1 // pred_region
      %687 = vsyncadd [#allocation4], 0
      %s689 = sshll.u32 [#allocation8], 4
      %s690 = int_to_ptr.vmem [resolvable:$true] %s689
      %s691 = sshll.u32 %s7, 4
      %s692 = int_to_ptr.hbm [resolvable:$true] %s691
      %694 = dma.vmem_to_hbm [thread:$0]  %s690, 32, %s692, [#allocation4]
    $region45: #{usps_mlp_forward.1} parent=1 // pred_fallthru
      _
    // Predicated region
    $region46: #{usps_mlp_forward.1} parent=1 // pred_check
      _
    $region47: #{usps_mlp_forward.1} parent=1 // pred_check_branch
      %696 = sbr.rel (0) target = $region49
    $region48: #{usps_mlp_forward.1} parent=1 // pred_region
      %698 = dma.done [#allocation4], 32
    $region49: #{usps_mlp_forward.1} parent=1 // pred_fallthru
      _
    %699 = vsyncpa [#allocation3], 1
    %700 = vsyncpa [#allocation6], 1
    %701 = vsyncpa [#allocation4], 1

</llo_original>
